<compile_context>
chip_gen: v7x
topology: tpu7x:2x2x1
jax: 0.10.0
libtpu: 0.0.40
codegen_flags: <defaults>
</compile_context>

<pallas_src>
import functools
import math

import jax
import jax.numpy as jnp
from jax import lax
from jax.experimental import pallas as pl
from jax.experimental.pallas import tpu as pltpu


def _focal_kernel(p_ref, t_ref, o_ref, *, power, rows, cols, tile_r, tile_c,
                  chunk_r, n_chunks, grid_r, grid_c, ragged_r, ragged_c,
                  unroll):
    r = pl.program_id(0)
    c = pl.program_id(1)

    @pl.when((r == 0) & (c == 0))
    def _init():
        o_ref[...] = jnp.zeros_like(o_ref)

    # How much of this block is real data (only used on ragged edge blocks).
    valid_r = rows - r * tile_r
    valid_c = cols - c * tile_c

    def accumulate(masked):
        def chunk(i, acc):
            start = pl.multiple_of(i * chunk_r, chunk_r)
            p = p_ref[pl.ds(start, chunk_r), :].astype(jnp.float32)
            t = t_ref[pl.ds(start, chunk_r), :].astype(jnp.float32)
            if masked:
                row_ids = start + lax.broadcasted_iota(
                    jnp.int32, (chunk_r, tile_c), 0)
                col_ids = lax.broadcasted_iota(
                    jnp.int32, (chunk_r, tile_c), 1)
                valid = (row_ids < valid_r) & (col_ids < valid_c)
                # Mask p as well as t: stale OOB data may be <= 0 or NaN and
                # would poison the accumulator through log().
                p = jnp.where(valid, p, 1.0)
                t = jnp.where(valid, t, 0.0)
            one_minus_p = 1.0 - p
            pw = one_minus_p
            for _ in range(power - 1):           # static integer power
                pw = pw * one_minus_p
            # maximum() guards log(0); reference would give -inf/NaN there.
            term = t * pw * jnp.log(jnp.maximum(p, 1e-12))
            return acc + term

        acc = lax.fori_loop(0, n_chunks, chunk,
                            jnp.zeros((chunk_r, tile_c), jnp.float32),
                            unroll=unroll)
        o_ref[...] += acc

    edge_conds = []
    if ragged_r:
        edge_conds.append(r == grid_r - 1)
    if ragged_c:
        edge_conds.append(c == grid_c - 1)

    if edge_conds:
        on_edge = functools.reduce(jnp.logical_or, edge_conds)

        @pl.when(on_edge)
        def _edge():
            accumulate(True)

        @pl.when(jnp.logical_not(on_edge))
        def _interior():
            accumulate(False)
    else:
        accumulate(False)


def _pick_view(shape):
    """Pick a free 2-D (rows, cols) reshape of the tensor that minimizes
    (8 sublane, 128 lane) vreg padding waste; ties prefer more rows."""
    total = math.prod(shape)
    best_key, best_view = None, (shape[0], total // shape[0])
    for i in range(1, len(shape)):
        rows = math.prod(shape[:i])
        cols = total // rows
        padded = (-(-rows // 8) * 8) * (-(-cols // 128) * 128)
        key = (padded / total, -rows)
        if best_key is None or key < best_key:
            best_key, best_view = key, (rows, cols)
    return best_view


def focal_loss(pred, true, power: int = 2):
    """pred, true: (b, c, w, h, d). Returns the scalar focal loss (float32)."""
    assert power >= 1, "power must be a positive integer"
    b, c, w, h, d = pred.shape
    rows, cols = _pick_view(pred.shape)

    # Free reshapes only: no padding copy, no dtype cast of `true`.
    p2 = pred.reshape(rows, cols)
    t2 = true.reshape(rows, cols)

    LANE, SUB = 128, 8
    CAP_C = 1024                    # lane width of one block / inner chunk
    TARGET_ELEMS = 512 * 1024       # ~2 MiB f32 per input block

    tile_c = cols if cols <= CAP_C else CAP_C
    padded_c = max(LANE, -(-tile_c // LANE) * LANE)

    if rows < SUB:
        tile_r = rows               # full dim: always a legal block shape
        chunk_r = rows
    else:
        target_r = max(SUB, (TARGET_ELEMS // padded_c) // SUB * SUB)
        tile_r = min(target_r, rows // SUB * SUB)   # multiple of 8, <= rows
        chunk_r = SUB
    n_chunks = max(1, tile_r // chunk_r)

    grid_r = pl.cdiv(rows, tile_r)
    grid_c = pl.cdiv(cols, tile_c)
    ragged_r = (rows % tile_r) != 0
    ragged_c = (cols % tile_c) != 0
    unroll = 2 if n_chunks >= 2 else 1

    kernel = functools.partial(
        _focal_kernel, power=power, rows=rows, cols=cols,
        tile_r=tile_r, tile_c=tile_c, chunk_r=chunk_r, n_chunks=n_chunks,
        grid_r=grid_r, grid_c=grid_c, ragged_r=ragged_r, ragged_c=ragged_c,
        unroll=unroll)

    partial_sums = pl.pallas_call(
        kernel,
        out_shape=jax.ShapeDtypeStruct((chunk_r, tile_c), jnp.float32),
        grid_spec=pltpu.PrefetchScalarGridSpec(
            num_scalar_prefetch=0,
            grid=(grid_r, grid_c),
            in_specs=[
                pl.BlockSpec((tile_r, tile_c), lambda r, c: (r, c)),
                pl.BlockSpec((tile_r, tile_c), lambda r, c: (r, c)),
            ],
            out_specs=pl.BlockSpec((chunk_r, tile_c), lambda r, c: (0, 0)),
        ),
        compiler_params=pltpu.CompilerParams(
            dimension_semantics=("arbitrary", "arbitrary")),
    )(p2, t2)

    total = jnp.sum(partial_sums, dtype=jnp.float32)
    return -total / jnp.float32(b * w * h * d)


def focal_loss_ref(pred, true, power: int = 2):
    b, c, w, h, d = pred.shape
    p = pred.reshape(b, -1).astype(jnp.float32)
    t = true.reshape(b, -1).astype(jnp.float32)
    loss = t * (1.0 - p) ** power * jnp.log(p)
    loss = jnp.sum(loss, axis=1) / (w * h * d)
    return -jnp.mean(loss)


if __name__ == "__main__":
    key = jax.random.PRNGKey(0)
    k1, k2 = jax.random.split(key)

    b, c, w, h, d = 2, 4, 8, 8, 4

    # pred must be a valid probability in (0, 1) so log(p) is finite.
    pred = jax.nn.sigmoid(jax.random.normal(k1, (b, c, w, h, d), jnp.float32))
    pred = jnp.clip(pred, 1e-6, 1.0 - 1e-6)
    # binary targets
    true = (jax.random.uniform(k2, (b, c, w, h, d)) > 0.5).astype(jnp.float32)

    out = jax.jit(functools.partial(focal_loss, power=2))(pred, true)
    out = jax.block_until_ready(out)

    ref = focal_loss_ref(pred, true, power=2)
    assert jnp.allclose(out, ref, rtol=1e-5, atol=1e-5), (out, ref)

    print("KERNEL_OK")
</pallas_src>

<mosaic_0001>
module attributes {stable_mosaic.version = 11 : i64} {
  func.func @_focal_kernel(%arg0: i32, %arg1: i32, %arg2: memref<8x256xf32, #tpu.memory_space<vmem>>, %arg3: memref<8x256xf32, #tpu.memory_space<vmem>>, %arg4: memref<8x256xf32, #tpu.memory_space<vmem>>) attributes {dimension_semantics = [#tpu.dimension_semantics<arbitrary>, #tpu.dimension_semantics<arbitrary>], iteration_bounds = array<i64: 1, 1>, scalar_prefetch = 0 : i64, scratch_operands = 0 : i64, tpu.core_type = #tpu.core_type<tc>, window_params = [{transform_indices = @transform_0, window_bounds = array<i64: 8, 256>}, {transform_indices = @transform_1, window_bounds = array<i64: 8, 256>}, {pipeline_mode = #tpu.pipeline_mode<synchronous>, transform_indices = @transform_2, window_bounds = array<i64: 8, 256>}]} {
    %c0_i32 = arith.constant 0 : i32
    %0 = arith.cmpi eq, %arg0, %c0_i32 : i32
    %c0_i32_0 = arith.constant 0 : i32
    %1 = arith.cmpi eq, %arg1, %c0_i32_0 : i32
    %2 = arith.andi %0, %1 : i1
    %3 = arith.extui %2 : i1 to i32
    %c0_i32_1 = arith.constant 0 : i32
    %4 = arith.cmpi ne, %3, %c0_i32_1 : i32
    scf.if %4 {
      %cst_10 = arith.constant 0.000000e+00 : f32
      %24 = vector.broadcast %cst_10 : f32 to vector<8x256xf32>
      %c0_11 = arith.constant 0 : index
      %c0_12 = arith.constant 0 : index
      %25 = vector.load %arg4[%c0_11, %c0_12] : memref<8x256xf32, #tpu.memory_space<vmem>>, vector<8x256xf32>
      tpu.vector_store %arg4[%c0_11, %c0_12], %24 {strides = array<i32>} : memref<8x256xf32, #tpu.memory_space<vmem>>, vector<8x256xf32>,
    } else {
    }
    %cst = arith.constant 0.000000e+00 : f32
    %5 = vector.broadcast %cst : f32 to vector<8x256xf32>
    %c0_i32_2 = arith.constant 0 : i32
    %c8_i32 = arith.constant 8 : i32
    %6 = arith.muli %c0_i32_2, %c8_i32 : i32
    %7 = tpu.assume_multiple %6, 8 : i32
    %8 = arith.index_cast %7 : i32 to index
    %c0 = arith.constant 0 : index
    %9 = vector.load %arg2[%8, %c0] : memref<8x256xf32, #tpu.memory_space<vmem>>, vector<8x256xf32>
    %10 = arith.index_cast %7 : i32 to index
    %c0_3 = arith.constant 0 : index
    %11 = vector.load %arg3[%10, %c0_3] : memref<8x256xf32, #tpu.memory_space<vmem>>, vector<8x256xf32>
    %cst_4 = arith.constant 1.000000e+00 : f32
    %12 = vector.broadcast %cst_4 : f32 to vector<8x256xf32>
    %13 = arith.subf %12, %9 : vector<8x256xf32>
    %14 = arith.mulf %13, %13 : vector<8x256xf32>
    %15 = arith.mulf %11, %14 : vector<8x256xf32>
    %cst_5 = arith.constant 9.99999996E-13 : f32
    %16 = vector.broadcast %cst_5 : f32 to vector<8x256xf32>
    %17 = arith.maximumf %9, %16 : vector<8x256xf32>
    %18 = math.log %17 : vector<8x256xf32>
    %19 = arith.mulf %15, %18 : vector<8x256xf32>
    %20 = arith.addf %5, %19 : vector<8x256xf32>
    %c1_i32 = arith.constant 1 : i32
    %c0_6 = arith.constant 0 : index
    %c0_7 = arith.constant 0 : index
    %21 = vector.load %arg4[%c0_6, %c0_7] : memref<8x256xf32, #tpu.memory_space<vmem>>, vector<8x256xf32>
    %22 = arith.addf %21, %20 : vector<8x256xf32>
    %c0_8 = arith.constant 0 : index
    %c0_9 = arith.constant 0 : index
    %23 = vector.load %arg4[%c0_8, %c0_9] : memref<8x256xf32, #tpu.memory_space<vmem>>, vector<8x256xf32>
    tpu.vector_store %arg4[%c0_8, %c0_9], %22 {strides = array<i32>} : memref<8x256xf32, #tpu.memory_space<vmem>>, vector<8x256xf32>,
    return
  }
  func.func @transform_0(%arg0: i32, %arg1: i32) -> (i32, i32) {
    %c0_i32 = arith.constant 0 : i32
    return %arg0, %arg1 : i32, i32
  }
  func.func @transform_1(%arg0: i32, %arg1: i32) -> (i32, i32) {
    %c0_i32 = arith.constant 0 : i32
    return %arg0, %arg1 : i32, i32
  }
  func.func @transform_2(%arg0: i32, %arg1: i32) -> (i32, i32) {
    %c0_i32 = arith.constant 0 : i32
    %c0_i32_0 = arith.constant 0 : i32
    %c0_i32_1 = arith.constant 0 : i32
    return %c0_i32, %c0_i32_0 : i32, i32
  }
}

</mosaic_0001>

<llo_original>
// kernel: focal_loss.1
$region0: #{focal_loss.1}
  #allocation0 [shape = 'u32[]', space=smem, size = 0x4, offset = 0x4, fixed_abs, tag = 'smem constant byte address 0x4 - core index']
  #allocation1 [shape = 'u32[144,128]{1,0:T(1,128)}', space=vmem, size = 0x12000, scoped, tag = 'internal scratch']
  %s0 = inlined_call_operand.vmem [shape: f32[8,256], index: 0, kind: input, shape index: {}]
  %s1 = inlined_call_operand.vmem [shape: f32[8,256], index: 1, kind: input, shape index: {}]
  %s2 = inlined_call_operand.vmem [shape: f32[8,256], index: 2, kind: output, shape index: {}]
  %s3 = sld [smem:[#allocation0]]
  $region22: #{focal_loss.1} parent=0
    _
  %s5 = ssub.s32 1, %s3
  %s6 = scalar_select 0, %s5, %s3
  // Predicated region
  $region2: #{focal_loss.1} parent=0 // pred_check
    _
  $region3: #{focal_loss.1} parent=0 // pred_check_branch
    %8 = sbr.rel (0) target = $region5
  $region4: #{focal_loss.1} parent=0 // pred_region
    _
  $region5: #{focal_loss.1} parent=0 // pred_fallthru
    _
  // Predicated region
  $region6: #{focal_loss.1} parent=0 // pred_check
    _
  $region7: #{focal_loss.1} parent=0 // pred_check_branch
    %10 = sbr.rel (0) target = $region9
  $region8: #{focal_loss.1} parent=0 // pred_region
    _
  $region9: #{focal_loss.1} parent=0 // pred_fallthru
    _
  %p11 = scmp.eq.s32.totalorder 0, 0
  %p12 = scmp.eq.s32.totalorder 0, 0
  %p13 = pnand %p11, %p12
  %p14 = pneg %p13
  // Predicated region
  $region10: #{focal_loss.1} parent=0 // pred_check
    _
  $region11: #{focal_loss.1} parent=0 // pred_check_branch
    %16 = sbr.rel (%p13) target = $region13
  $region12: #{focal_loss.1} parent=0 // pred_region
    %17 = vst [vmem:[%s2] sm:$0xff] 0.0
    %18 = vst [vmem:[%s2 + $0x8] sm:$0xff] 0.0
  $region13: #{focal_loss.1} parent=0 // pred_fallthru
    _
  %s19 = smul.u32 0, 2
  %s20 = smul.addr %s19, 8
  %s21 = scalar_lea.vmem %s0, %s20
  %v22 = vld [vmem:[%s21] sm:$0xff]
  %v23 = vld [vmem:[%s21 + $0x8] sm:$0xff]
  %s24 = smul.addr %s19, 8
  %s25 = scalar_lea.vmem %s1, %s24
  %v26 = vld [vmem:[%s25] sm:$0xff]
  %v27 = vld [vmem:[%s25 + $0x8] sm:$0xff]
  %v28 = vsub.f32 1.0, %v22
  %v29 = vsub.f32 1.0, %v23
  %v30 = vmul.f32 %v28, %v28
  %v31 = vmul.f32 %v29, %v29
  %v32 = vmul.f32 %v26, %v30
  %v33 = vmul.f32 %v27, %v31
  %v34 = vmax.f32 %v22, 1e-12
  %v35 = vmax.f32 %v23, 1e-12
  %v36 = vlog2.pop %v34
  %v37 = vmul.f32 %v36, 0.6931472
  %v38 = vlog2.pop %v35
  %v39 = vmul.f32 %v38, 0.6931472
  %v40 = vmul.f32 %v32, %v37
  %v41 = vmul.f32 %v33, %v39
  %v42 = vadd.f32 %v40, 0.0
  %v43 = vadd.f32 %v41, 0.0
  %v44 = vld [vmem:[%s2] sm:$0xff]
  %v45 = vld [vmem:[%s2 + $0x8] sm:$0xff]
  %v46 = vadd.f32 %v44, %v42
  %v47 = vadd.f32 %v45, %v43
  %48 = vst [vmem:[%s2] sm:$0xff] %v46
  %49 = vst [vmem:[%s2 + $0x8] sm:$0xff] %v47
  // Predicated region
  $region14: #{focal_loss.1} parent=0 // pred_check
    _
  $region15: #{focal_loss.1} parent=0 // pred_check_branch
    %51 = sbr.rel (0) target = $region17
  $region16: #{focal_loss.1} parent=0 // pred_region
    _
  $region17: #{focal_loss.1} parent=0 // pred_fallthru
    _
  // Predicated region
  $region18: #{focal_loss.1} parent=0 // pred_check
    _
  $region19: #{focal_loss.1} parent=0 // pred_check_branch
    %53 = sbr.rel (0) target = $region21
  $region20: #{focal_loss.1} parent=0 // pred_region
    _
  $region21: #{focal_loss.1} parent=0 // pred_fallthru
    _

</llo_original>
